<compile_context>
chip_gen: v5e
topology: v5e:2x2
jax: 0.10.0
libtpu: 0.0.40
codegen_flags: <defaults>
</compile_context>

<pallas_src>
import jax
import jax.numpy as jnp
from jax.experimental import pallas as pl
from jax.experimental.pallas import tpu as pltpu


def _make_concat_dma_kernel(widths):
    """Build a kernel that concatenates M flat (N, width_i) HBM arrays into a
    single (N, sum(widths)) HBM array via direct HBM->HBM async copies.

    `widths` are static Python ints, so every destination offset is static and
    each copy is a simple strided-slab DMA descriptor.
    """
    offsets = []
    off = 0
    for w in widths:
        offsets.append(off)
        off += w
    num_inputs = len(widths)

    def kernel(*refs):
        # refs = (in_ref_0, ..., in_ref_{M-1}, out_ref, dma_sems)
        in_refs = refs[:num_inputs]
        out_ref = refs[num_inputs]
        sems = refs[num_inputs + 1]

        copies = []
        for m, (r, off_m, w_m) in enumerate(zip(in_refs, offsets, widths)):
            cp = pltpu.make_async_copy(
                r,                                      # HBM source (full)
                out_ref.at[:, off_m:off_m + w_m],       # HBM dest slice
                sems.at[m],
            )
            cp.start()
            copies.append(cp)
        # All M transfers are in flight concurrently; block until done.
        for cp in copies:
            cp.wait()

    return kernel


class Concat:
    """JAX/Pallas port of the PyTorch Concat module (cat over dim=1, NCHW)."""

    def __init__(self, mode):
        self.mode = tuple(mode)

    def __call__(self, x: dict):
        feats = [x[m] for m in self.mode]

        n, _, h, w = feats[0].shape
        dtype = feats[0].dtype
        for f in feats:
            assert f.shape[0] == n and f.shape[2] == h and f.shape[3] == w
            assert f.dtype == dtype

        channels = [int(f.shape[1]) for f in feats]
        c_total = sum(channels)
        hw = h * w

        # Flat view: (N, C, H, W) -> (N, C*H*W).  Channel-concat in NCHW is
        # exactly concat along this flattened axis; for row-major arrays this
        # reshape is metadata-only (no data movement outside the kernel).
        flat_feats = [f.reshape(n, c * hw) for f, c in zip(feats, channels)]
        widths = [c * hw for c in channels]
        out_width = c_total * hw
        itemsize = jnp.dtype(dtype).itemsize

        kernel = _make_concat_dma_kernel(tuple(widths))

        fn = pl.pallas_call(
            kernel,
            out_shape=jax.ShapeDtypeStruct((n, out_width), dtype),
            # Raw HBM refs: no automatic HBM<->VMEM staging, no grid tiling.
            in_specs=[pl.BlockSpec(memory_space=pl.ANY) for _ in widths],
            out_specs=pl.BlockSpec(memory_space=pl.ANY),
            scratch_shapes=[pltpu.SemaphoreType.DMA((len(widths),))],
            cost_estimate=pl.CostEstimate(
                flops=0,
                transcendentals=0,
                bytes_accessed=2 * n * out_width * itemsize,
            ),
        )
        out_flat = fn(*flat_feats)
        return out_flat.reshape(n, c_total, h, w)


if __name__ == "__main__":
    key = jax.random.PRNGKey(0)
    k_rgb, k_depth, k_flow = jax.random.split(key, 3)

    # Small synthetic multimodal feature maps, NCHW.
    x = {
        "rgb": jax.random.normal(k_rgb, (2, 4, 16, 16), dtype=jnp.float32),
        "depth": jax.random.normal(k_depth, (2, 3, 16, 16), dtype=jnp.float32),
        "flow": jax.random.normal(k_flow, (2, 5, 16, 16), dtype=jnp.float32),
    }

    mode = ("rgb", "depth", "flow")
    concat = Concat(mode)

    out = concat(x)
    out = jax.block_until_ready(out)

    # Reference check against plain JAX concatenate (same semantics as
    # torch.cat(..., dim=1)).
    ref = jnp.concatenate([x[m] for m in mode], axis=1)
    assert out.shape == (2, 12, 16, 16), out.shape
    assert out.dtype == jnp.float32
    assert jnp.array_equal(out, ref), "mismatch vs reference concat"

    print("KERNEL_OK")
</pallas_src>

<mosaic_0001>
module attributes {stable_mosaic.version = 11 : i64} {
  func.func @kernel(%arg0: memref<2x1024xf32, #tpu.memory_space<any>>, %arg1: memref<2x768xf32, #tpu.memory_space<any>>, %arg2: memref<2x1280xf32, #tpu.memory_space<any>>, %arg3: memref<2x3072xf32, #tpu.memory_space<any>>, %arg4: memref<3x!tpu.dma_semaphore, #tpu.memory_space<semaphore_mem>>) attributes {dimension_semantics = [], scalar_prefetch = 0 : i64, scratch_operands = 1 : i64, tpu.core_type = #tpu.core_type<tc>} {
    %c0_i32 = arith.constant 0 : i32
    %c0_i32_0 = arith.constant 0 : i32
    %c0_i32_1 = arith.constant 0 : i32
    %0 = tpu.memref_slice %arg3[%c0_i32_0, %c0_i32_1] : memref<2x3072xf32, #tpu.memory_space<any>> -> memref<2x1024xf32, #tpu.memory_space<any>>
    %1 = tpu.memref_slice %arg4[%c0_i32] : memref<3x!tpu.dma_semaphore, #tpu.memory_space<semaphore_mem>> -> memref<1x!tpu.dma_semaphore, #tpu.memory_space<semaphore_mem>>
    %2 = tpu.memref_squeeze %1 : memref<1x!tpu.dma_semaphore, #tpu.memory_space<semaphore_mem>> -> memref<!tpu.dma_semaphore, #tpu.memory_space<semaphore_mem>>
    tpu.enqueue_dma source(%arg0 : memref<2x1024xf32, #tpu.memory_space<any>>) target(%0 : memref<2x1024xf32, #tpu.memory_space<any>>) target_semaphore(%2 : memref<!tpu.dma_semaphore, #tpu.memory_space<semaphore_mem>>)
    %c1_i32 = arith.constant 1 : i32
    %c0_i32_2 = arith.constant 0 : i32
    %c1024_i32 = arith.constant 1024 : i32
    %3 = tpu.memref_slice %arg3[%c0_i32_2, %c1024_i32] : memref<2x3072xf32, #tpu.memory_space<any>> -> memref<2x768xf32, #tpu.memory_space<any>>
    %4 = tpu.memref_slice %arg4[%c1_i32] : memref<3x!tpu.dma_semaphore, #tpu.memory_space<semaphore_mem>> -> memref<1x!tpu.dma_semaphore, #tpu.memory_space<semaphore_mem>>
    %5 = tpu.memref_squeeze %4 : memref<1x!tpu.dma_semaphore, #tpu.memory_space<semaphore_mem>> -> memref<!tpu.dma_semaphore, #tpu.memory_space<semaphore_mem>>
    tpu.enqueue_dma source(%arg1 : memref<2x768xf32, #tpu.memory_space<any>>) target(%3 : memref<2x768xf32, #tpu.memory_space<any>>) target_semaphore(%5 : memref<!tpu.dma_semaphore, #tpu.memory_space<semaphore_mem>>)
    %c2_i32 = arith.constant 2 : i32
    %c0_i32_3 = arith.constant 0 : i32
    %c1792_i32 = arith.constant 1792 : i32
    %6 = tpu.memref_slice %arg3[%c0_i32_3, %c1792_i32] : memref<2x3072xf32, #tpu.memory_space<any>> -> memref<2x1280xf32, #tpu.memory_space<any>>
    %7 = tpu.memref_slice %arg4[%c2_i32] : memref<3x!tpu.dma_semaphore, #tpu.memory_space<semaphore_mem>> -> memref<1x!tpu.dma_semaphore, #tpu.memory_space<semaphore_mem>>
    %8 = tpu.memref_squeeze %7 : memref<1x!tpu.dma_semaphore, #tpu.memory_space<semaphore_mem>> -> memref<!tpu.dma_semaphore, #tpu.memory_space<semaphore_mem>>
    tpu.enqueue_dma source(%arg2 : memref<2x1280xf32, #tpu.memory_space<any>>) target(%6 : memref<2x1280xf32, #tpu.memory_space<any>>) target_semaphore(%8 : memref<!tpu.dma_semaphore, #tpu.memory_space<semaphore_mem>>)
    %c0_i32_4 = arith.constant 0 : i32
    %c0_i32_5 = arith.constant 0 : i32
    %c0_i32_6 = arith.constant 0 : i32
    %9 = tpu.memref_slice %arg3[%c0_i32_5, %c0_i32_6] : memref<2x3072xf32, #tpu.memory_space<any>> -> memref<2x1024xf32, #tpu.memory_space<any>>
    %10 = tpu.memref_slice %arg4[%c0_i32_4] : memref<3x!tpu.dma_semaphore, #tpu.memory_space<semaphore_mem>> -> memref<1x!tpu.dma_semaphore, #tpu.memory_space<semaphore_mem>>
    %11 = tpu.memref_squeeze %10 : memref<1x!tpu.dma_semaphore, #tpu.memory_space<semaphore_mem>> -> memref<!tpu.dma_semaphore, #tpu.memory_space<semaphore_mem>>
    tpu.wait_dma2 semaphore(%11 : memref<!tpu.dma_semaphore, #tpu.memory_space<semaphore_mem>>) src(%arg0 : memref<2x1024xf32, #tpu.memory_space<any>>) dst(%9 : memref<2x1024xf32, #tpu.memory_space<any>>)
    %c1_i32_7 = arith.constant 1 : i32
    %c0_i32_8 = arith.constant 0 : i32
    %c1024_i32_9 = arith.constant 1024 : i32
    %12 = tpu.memref_slice %arg3[%c0_i32_8, %c1024_i32_9] : memref<2x3072xf32, #tpu.memory_space<any>> -> memref<2x768xf32, #tpu.memory_space<any>>
    %13 = tpu.memref_slice %arg4[%c1_i32_7] : memref<3x!tpu.dma_semaphore, #tpu.memory_space<semaphore_mem>> -> memref<1x!tpu.dma_semaphore, #tpu.memory_space<semaphore_mem>>
    %14 = tpu.memref_squeeze %13 : memref<1x!tpu.dma_semaphore, #tpu.memory_space<semaphore_mem>> -> memref<!tpu.dma_semaphore, #tpu.memory_space<semaphore_mem>>
    tpu.wait_dma2 semaphore(%14 : memref<!tpu.dma_semaphore, #tpu.memory_space<semaphore_mem>>) src(%arg1 : memref<2x768xf32, #tpu.memory_space<any>>) dst(%12 : memref<2x768xf32, #tpu.memory_space<any>>)
    %c2_i32_10 = arith.constant 2 : i32
    %c0_i32_11 = arith.constant 0 : i32
    %c1792_i32_12 = arith.constant 1792 : i32
    %15 = tpu.memref_slice %arg3[%c0_i32_11, %c1792_i32_12] : memref<2x3072xf32, #tpu.memory_space<any>> -> memref<2x1280xf32, #tpu.memory_space<any>>
    %16 = tpu.memref_slice %arg4[%c2_i32_10] : memref<3x!tpu.dma_semaphore, #tpu.memory_space<semaphore_mem>> -> memref<1x!tpu.dma_semaphore, #tpu.memory_space<semaphore_mem>>
    %17 = tpu.memref_squeeze %16 : memref<1x!tpu.dma_semaphore, #tpu.memory_space<semaphore_mem>> -> memref<!tpu.dma_semaphore, #tpu.memory_space<semaphore_mem>>
    tpu.wait_dma2 semaphore(%17 : memref<!tpu.dma_semaphore, #tpu.memory_space<semaphore_mem>>) src(%arg2 : memref<2x1280xf32, #tpu.memory_space<any>>) dst(%15 : memref<2x1280xf32, #tpu.memory_space<any>>)
    return
  }
}

</mosaic_0001>

<llo_original>
// kernel: tpu_custom_call.1
$region0: #{tpu_custom_call.1}
  #allocation0 [shape = 'u32[]', space=smem, size = 0x4, offset = 0x4, fixed_abs, tag = 'smem constant byte address 0x4 - core index']
  #allocation1 [shape = 'u32[72,128]{1,0:T(1,128)}', space=vmem, size = 0x9000, scoped, tag = 'internal scratch']
  #allocation2 [shape = 's32[3]{0}', space=sflag, size = 0xc, scoped, tag = 'scratch operand']
  #allocation3 [shape = 's32[]', space=sflag, size = 0x4, offset = 0, fixed_abs, tag = 'sflag constant byte address 0x0 - dummy sync flag']
  #allocation4 [shape = 'u32[0]{0}', space=smem, size = 0, offset = 0, fixed_abs, tag = 'smem constant byte address 0x0 - null']
  #allocation5 [shape = 's32[]', space=sflag, size = 0x4, offset = 0, fixed_abs, tag = 'sflag constant byte address 0x0 - dummy sync flag']
  #allocation6 [shape = 'u32[0]{0}', space=smem, size = 0, offset = 0, fixed_abs, tag = 'smem constant byte address 0x0 - null']
  #allocation7 [shape = 's32[]', space=sflag, size = 0x4, offset = 0, fixed_abs, tag = 'sflag constant byte address 0x0 - dummy sync flag']
  #allocation8 [shape = 'u32[0]{0}', space=smem, size = 0, offset = 0, fixed_abs, tag = 'smem constant byte address 0x0 - null']
  %s0 = inlined_call_operand.hbm [shape: f32[2,1024], index: 0, kind: input, shape index: {}]
  %s1 = inlined_call_operand.hbm [shape: f32[2,768], index: 1, kind: input, shape index: {}]
  %s2 = inlined_call_operand.hbm [shape: f32[2,1280], index: 2, kind: input, shape index: {}]
  %s3 = inlined_call_operand.hbm [shape: f32[2,3072], index: 3, kind: output, shape index: {}]
  %s4 = sld [smem:[#allocation0]]
  $region2: #{tpu_custom_call.1} parent=0
    _
  %s6 = ssub.s32 1, %s4
  %s7 = scalar_select 0, %s6, %s4
  %s9 = sshll.u32 1, 14
  %s10 = sxor.u32 4294967295, %s9
  %s12 = sshll.u32 %s0, 4
  %s13 = int_to_ptr.hbm [resolvable:$true] %s12
  %s14 = sshll.u32 %s3, 4
  %s15 = int_to_ptr.hbm [resolvable:$true] %s14
  %18 = dma.general %s13, 256, %s15, [#allocation2], [#allocation3], [#allocation4], 0, 0
  %s19 = scalar_lea.hbm %s3, 16
  %s20 = scalar_lea.sflag [#allocation2], 1
  %s22 = sshll.u32 1, 14
  %s23 = sxor.u32 4294967295, %s22
  %s25 = sshll.u32 %s1, 4
  %s26 = int_to_ptr.hbm [resolvable:$true] %s25
  %s27 = sshll.u32 %s19, 4
  %s28 = int_to_ptr.hbm [resolvable:$true] %s27
  %31 = dma.general %s26, 192, %s28, %s20, [#allocation5], [#allocation6], 0, 0
  %s32 = scalar_lea.hbm %s3, 28
  %s33 = scalar_lea.sflag [#allocation2], 2
  %s35 = sshll.u32 1, 14
  %s36 = sxor.u32 4294967295, %s35
  %s38 = sshll.u32 %s2, 4
  %s39 = int_to_ptr.hbm [resolvable:$true] %s38
  %s40 = sshll.u32 %s32, 4
  %s41 = int_to_ptr.hbm [resolvable:$true] %s40
  %44 = dma.general %s39, 320, %s41, %s33, [#allocation7], [#allocation8], 0, 0
  %s45 = smul.u32 2, 1
  %s46 = smul.u32 %s45, 8
  %s47 = sshll.u32 %s46, 4
  %48 = dma.done [#allocation2], %s47
  %s49 = smul.u32 %s45, 6
  %s50 = sshll.u32 %s49, 4
  %51 = dma.done %s20, %s50
  %s52 = smul.u32 %s45, 10
  %s53 = sshll.u32 %s52, 4
  %54 = dma.done %s33, %s53
  %55 = vsyncmov [#allocation2]
  %s56 = vpop.sfrf %55
  %p57 = scmp.eq.s32.totalorder %s56, 0
  %p58 = pneg %p57
  %60 = shalt.err (%p58)
  %s61 = scalar_lea.sflag [#allocation2], 1
  %62 = vsyncmov %s61
  %s63 = vpop.sfrf %62
  %p64 = scmp.eq.s32.totalorder %s63, 0
  %p65 = pneg %p64
  %67 = shalt.err (%p65)
  %s68 = scalar_lea.sflag [#allocation2], 2
  %69 = vsyncmov %s68
  %s70 = vpop.sfrf %69
  %p71 = scmp.eq.s32.totalorder %s70, 0
  %p72 = pneg %p71
  %74 = shalt.err (%p72)

</llo_original>
